<compile_context>
chip_gen: v5e
topology: v5e:2x2
jax: 0.10.0
libtpu: 0.0.40
codegen_flags: <defaults>
</compile_context>

<pallas_src>
import functools

import jax
import jax.numpy as jnp
from jax.experimental import pallas as pl
from jax.experimental.pallas import tpu as pltpu


def _round_up(x, m):
    return (x + m - 1) // m * m


def _pick_tile_cols(n, k, e, requested, emit_dist, budget_bytes):
    """Largest multiple-of-128 column tile <= requested that fits the VMEM budget."""
    cap = min(_round_up(int(requested), 128), _round_up(n, 128))
    tn = max(cap, 128)
    while tn > 128:
        resident = k * e * 4                                   # single-buffered codebook
        streams = 2 * tn * 4 * (e                              # input columns (dbl-buffered)
                                + e                            # quantized^T out
                                + 8                            # idx row (sublane-padded)
                                + (k if emit_dist else 0))     # distances out
        live = tn * 4 * (2 * k + e + (k if emit_dist else 0))  # d, onehot, q, d^T
        if resident + streams + live <= budget_bytes:
            break
        tn -= 128
    return tn


def _vq_kernel(x_ref, w_ref, idx_ref, quant_ref, sse_ref, *dist_refs,
               n_total, emit_dist, matmul_dtype):
    """Quantize one tile of TN flattened input vectors (columns of an (E, TN)
    block) against the full (K, E) codebook.

    Outputs (all lane-dense): int32 indices (1, TN), quantized^T (E, TN) and —
    when `emit_dist` — the distances tile already transposed to (TN, K).
    A per-tile SSE partial (computed from d_min, not a separate err^2 pass) is
    the only reduction; the grid axis carries no state and stays parallel."""
    i = pl.program_id(0)

    f = x_ref[...].astype(jnp.float32)            # (E, TN)  columns = input vectors
    w = w_ref[...].astype(jnp.float32)            # (K, E)   codebook (resident, single-buffered)
    e_dim, tn = f.shape
    k = w.shape[0]

    # Codebook row norms recomputed from the resident tile (cross-lane reduce on
    # the XLU; removes the padded (K,1) input stream a hoisted wsq would need).
    wsq = jnp.sum(w * w, axis=1, keepdims=True)                        # (K, 1)
    f_sq = jnp.sum(f * f, axis=0, keepdims=True)                       # (1, TN)

    # distances^T[k, n] = ||f_n||^2 + ||w_k||^2 - 2 * w_k . f_n   -> (K, TN)
    xw = jax.lax.dot_general(w.astype(matmul_dtype), f.astype(matmul_dtype),
                             (((1,), (0,)), ((), ())),
                             preferred_element_type=jnp.float32)       # (K, TN)
    d = f_sq + wsq - 2.0 * xw

    # int32 argmin over the codebook axis (first occurrence on ties, like torch.argmin)
    row = jax.lax.broadcasted_iota(jnp.int32, (k, tn), 0)              # (K, TN)
    d_min = jnp.min(d, axis=0, keepdims=True)                          # (1, TN)
    idx = jnp.min(jnp.where(d == d_min, row, k), axis=0, keepdims=True)  # (1, TN) int32
    idx_ref[...] = idx                                                 # lane-dense store

    # one-hot (K, TN) and quantized vectors W^T @ onehot -> (E, TN) (exact, f32 MXU)
    onehot = (row == idx).astype(jnp.float32)                          # (K, TN)
    q = jax.lax.dot_general(w, onehot, (((0,), (0,)), ((), ())),
                            preferred_element_type=jnp.float32)        # (E, TN)
    quant_ref[...] = q.astype(quant_ref.dtype)

    # Per-tile partial SSE directly from d_min (== ||f_n - w_idx||^2, clamp the
    # small negative cancellation error); mask ragged (out-of-bounds) columns.
    col = jax.lax.broadcasted_iota(jnp.int32, (1, tn), 1) + i * tn
    valid = col < n_total                                              # (1, TN)
    masked = jnp.where(valid, jnp.maximum(d_min, 0.0), 0.0)            # (1, TN)
    sse_ref[0] = jnp.sum(masked, axis=1, keepdims=True)                # (1, 1)

    if emit_dist:
        # Per-tile XLU transpose so the HBM distances output is already (N, K)-major
        # (no wrapper-side .T); fully lane-dense whenever K >= 128.
        dist_refs[0][...] = d.T                                        # (TN, K)


def vector_quantizer_pallas(x, embedding_weight, commitment_cost, *,
                            tile_cols=512,
                            compute_distances=True,
                            compute_encodings=True,
                            use_bf16_matmul=False,
                            vmem_budget_bytes=40 * 1024 * 1024):
    """Forward pass of VectorQuantizer.

    x: (E, B, T) float32 (dim0 must equal embedding_dim, as the PyTorch module requires)
    embedding_weight: (K, E) float32 codebook
    Returns the same tuple structure as the PyTorch forward (training-mode path).
    Set compute_distances / compute_encodings False to skip those HBM-heavy
    outputs when the caller only needs loss / quantized / indices / perplexity.
    """
    E, B, T = x.shape
    K, E2 = embedding_weight.shape
    assert E == E2, "dim0 of the input must equal embedding_dim"

    N = B * T
    # Free reshape (contiguous trailing-dim merge) — no HBM-round-trip transpose.
    x_flat = x.reshape(E, N).astype(jnp.float32)                       # (E, N)
    w = embedding_weight.astype(jnp.float32)                           # (K, E)

    tn = _pick_tile_cols(N, K, E, tile_cols, compute_distances, vmem_budget_bytes)
    n_steps = pl.cdiv(N, tn)

    matmul_dtype = jnp.bfloat16 if use_bf16_matmul else jnp.float32
    kernel = functools.partial(_vq_kernel, n_total=N,
                               emit_dist=compute_distances,
                               matmul_dtype=matmul_dtype)

    in_specs = [
        pl.BlockSpec((E, tn), lambda i: (0, i)),                       # input columns, tiled
        pl.BlockSpec((K, E), lambda i: (0, 0),
                     pipeline_mode=pl.Buffered(1)),                    # codebook, resident, single buffer
    ]
    out_specs = [
        pl.BlockSpec((1, tn), lambda i: (0, i)),                       # encoding indices (lane-dense)
        pl.BlockSpec((E, tn), lambda i: (0, i)),                       # quantized^T
        pl.BlockSpec((1, 1, 1), lambda i: (i, 0, 0)),                  # per-tile SSE partial
    ]
    out_shape = [
        jax.ShapeDtypeStruct((1, N), jnp.int32),
        jax.ShapeDtypeStruct((E, N), jnp.float32),
        jax.ShapeDtypeStruct((n_steps, 1, 1), jnp.float32),
    ]
    if compute_distances:
        out_specs.append(pl.BlockSpec((tn, K), lambda i: (i, 0)))      # distances, (N, K)-major
        out_shape.append(jax.ShapeDtypeStruct((N, K), jnp.float32))

    # TODO(synk): for very large K (>= ~4096) add an inner K-chunk loop with a
    # running (min, argmin) in scratch instead of materializing the full (K, TN)
    # d / one-hot, to bound VMEM on v7x.
    grid_spec = pltpu.PrefetchScalarGridSpec(
        num_scalar_prefetch=0,
        grid=(n_steps,),
        in_specs=in_specs,
        out_specs=out_specs,
    )

    outs = pl.pallas_call(
        kernel,
        grid_spec=grid_spec,
        out_shape=tuple(out_shape),
        compiler_params=pltpu.CompilerParams(
            dimension_semantics=("parallel",),            # no cross-step state -> megacore OK
            vmem_limit_bytes=64 * 1024 * 1024),
    )(x_flat, w)

    idx_row, quant_t, sse_parts = outs[0], outs[1], outs[2]
    dist_nk = outs[3] if compute_distances else None

    # ---- finalize reductions in the wrapper (tiny) ----
    idx = idx_row[0]                                                   # (N,) int32
    sse = jnp.sum(sse_parts)
    counts = jnp.zeros((K,), jnp.float32).at[idx].add(1.0)             # bincount on N ints

    e_latent_loss = sse / (N * E)
    # Forward values of e_latent_loss / q_latent_loss are identical (detach only
    # changes the gradient graph, not the forward value).
    q_latent_loss = e_latent_loss
    commitment_loss = commitment_cost * e_latent_loss
    vq_loss = q_latent_loss + commitment_loss

    avg_probs = counts / N
    perplexity = jnp.exp(-jnp.sum(avg_probs * jnp.log(avg_probs + 1e-10)))

    # quantized^T reshaped to (E, B, T) IS quantized.permute(2, 0, 1) — no transpose.
    quantized_out = quant_t.reshape(E, B, T)
    encoding_indices = idx.reshape(N, 1)

    # The PyTorch module names the post-permute dims (_, time, batch_size) where
    # "batch_size" is actually E; it calls .view(batch_size, time, -1) — reproduce it.
    encodings_view = None
    if compute_encodings:
        encodings_view = jax.nn.one_hot(idx, K, dtype=jnp.float32).reshape(E, T, -1)
    distances_view = None
    if compute_distances:
        distances_view = dist_nk.reshape(E, T, -1)

    losses = {
        'e_latent_loss': e_latent_loss,
        'q_latent_loss': q_latent_loss,
        'commitment_loss': commitment_loss,
        'vq_loss': vq_loss,
    }

    # TODO(synk): forward-only — the straight-through / detach gradient semantics
    # of the PyTorch module would need a jax.custom_vjp wrapper.
    # TODO(synk): eval-only pairwise torch.dist lists (encoding_distances,
    # embedding_distances, frames_vs_embedding_distances) and
    # concatenated_quantized are None on the training-mode path reproduced here.
    return (vq_loss, quantized_out, perplexity, encodings_view, distances_view,
            encoding_indices, losses, None, None, None, None)


if __name__ == "__main__":
    num_embeddings = 64     # K
    embedding_dim = 32      # E
    commitment_cost = 0.25
    B, T = 32, 8            # "other" dims of the (E, B, T) input -> N = 256 vectors

    key = jax.random.PRNGKey(0)
    kx, kw = jax.random.split(key)
    x = jax.random.normal(kx, (embedding_dim, B, T), dtype=jnp.float32)
    emb_w = jax.random.uniform(
        kw, (num_embeddings, embedding_dim),
        minval=-1.0 / num_embeddings, maxval=1.0 / num_embeddings,
        dtype=jnp.float32)

    # tile_cols=128 -> 2 grid steps at this size (exercises the tiled/partials path).
    outs = vector_quantizer_pallas(x, emb_w, commitment_cost, tile_cols=128)
    outs = jax.block_until_ready(outs)
    (vq_loss, quantized, perplexity, encodings, distances, enc_idx,
     loss_dict, *_rest) = outs

    # --- pure-JAX reference check ---
    inp = jnp.transpose(x, (1, 2, 0)).reshape(-1, embedding_dim)
    d_ref = (jnp.sum(inp ** 2, axis=1, keepdims=True)
             + jnp.sum(emb_w ** 2, axis=1)
             - 2.0 * inp @ emb_w.T)
    idx_ref = jnp.argmin(d_ref, axis=1)
    q_ref = emb_w[idx_ref]
    e_ref = jnp.mean((q_ref - inp) ** 2)
    vq_ref = e_ref + commitment_cost * e_ref
    onehot_ref = jax.nn.one_hot(idx_ref, num_embeddings, dtype=jnp.float32)
    avg_ref = jnp.mean(onehot_ref, axis=0)
    perp_ref = jnp.exp(-jnp.sum(avg_ref * jnp.log(avg_ref + 1e-10)))

    assert jnp.allclose(distances.reshape(-1, num_embeddings), d_ref,
                        atol=1e-3, rtol=1e-4)
    assert jnp.array_equal(enc_idx[:, 0], idx_ref.astype(jnp.int32))
    assert jnp.allclose(
        jnp.transpose(quantized, (1, 2, 0)).reshape(-1, embedding_dim),
        q_ref, atol=1e-5)
    assert jnp.allclose(encodings.reshape(-1, num_embeddings), onehot_ref)
    assert jnp.allclose(vq_loss, vq_ref, atol=1e-4, rtol=1e-4)
    assert jnp.allclose(perplexity, perp_ref, atol=1e-4, rtol=1e-4)

    # --- lean path: no distances / encodings writeback (the 2-5x HBM saving mode) ---
    lean = vector_quantizer_pallas(x, emb_w, commitment_cost, tile_cols=128,
                                   compute_distances=False, compute_encodings=False)
    lean = jax.block_until_ready(lean)
    vq_loss_lean, quantized_lean = lean[0], lean[1]
    assert lean[3] is None and lean[4] is None
    assert jnp.allclose(vq_loss_lean, vq_loss, atol=1e-6)
    assert jnp.allclose(quantized_lean, quantized, atol=1e-6)

    print("KERNEL_OK")
</pallas_src>

<mosaic_0001>
module attributes {stable_mosaic.version = 11 : i64} {
  func.func @_vq_kernel(%arg0: i32, %arg1: memref<32x128xf32, #tpu.memory_space<vmem>>, %arg2: memref<64x32xf32, #tpu.memory_space<vmem>>, %arg3: memref<1x128xi32, #tpu.memory_space<vmem>>, %arg4: memref<32x128xf32, #tpu.memory_space<vmem>>, %arg5: memref<1x1x1xf32, #tpu.memory_space<vmem>>, %arg6: memref<128x64xf32, #tpu.memory_space<vmem>>) attributes {dimension_semantics = [#tpu.dimension_semantics<parallel>], iteration_bounds = array<i64: 2>, scalar_prefetch = 0 : i64, scratch_operands = 0 : i64, tpu.core_type = #tpu.core_type<tc>, window_params = [{transform_indices = @transform_0, window_bounds = array<i64: 32, 128>}, {pipeline_mode = #tpu.pipeline_mode<synchronous>, transform_indices = @transform_1, window_bounds = array<i64: 64, 32>}, {transform_indices = @transform_2, window_bounds = array<i64: 1, 128>}, {transform_indices = @transform_3, window_bounds = array<i64: 32, 128>}, {transform_indices = @transform_4, window_bounds = array<i64: 1, 1, 1>}, {transform_indices = @transform_5, window_bounds = array<i64: 128, 64>}]} {
    %c0 = arith.constant 0 : index
    %c0_0 = arith.constant 0 : index
    %0 = vector.load %arg1[%c0, %c0_0] : memref<32x128xf32, #tpu.memory_space<vmem>>, vector<32x128xf32>
    %c0_1 = arith.constant 0 : index
    %c0_2 = arith.constant 0 : index
    %1 = vector.load %arg2[%c0_1, %c0_2] : memref<64x32xf32, #tpu.memory_space<vmem>>, vector<64x32xf32>
    %2 = arith.mulf %1, %1 : vector<64x32xf32>
    %cst = arith.constant dense<0.000000e+00> : vector<64xf32>
    %3 = vector.multi_reduction <add>, %2, %cst [1] : vector<64x32xf32> to vector<64xf32>
    %4 = vector.shape_cast %3 : vector<64xf32> to vector<64x1xf32>
    %5 = arith.mulf %0, %0 : vector<32x128xf32>
    %cst_3 = arith.constant dense<0.000000e+00> : vector<128xf32>
    %6 = vector.multi_reduction <add>, %5, %cst_3 [0] : vector<32x128xf32> to vector<128xf32>
    %7 = vector.shape_cast %6 : vector<128xf32> to vector<1x128xf32>
    %cst_4 = arith.constant dense<0.000000e+00> : vector<64x128xf32>
    %8 = tpu.matmul %1, %0, %cst_4 {dimension_numbers = #tpu.dot_dimension_numbers<[1], [0], [0], [1], [0, 0, 1, 1], [], []>} : vector<64x32xf32>, vector<32x128xf32>, vector<64x128xf32> -> vector<64x128xf32>
    %9 = vector.broadcast %7 : vector<1x128xf32> to vector<64x128xf32>
    %10 = vector.broadcast %4 : vector<64x1xf32> to vector<64x128xf32>
    %11 = arith.addf %9, %10 : vector<64x128xf32>
    %cst_5 = arith.constant 2.000000e+00 : f32
    %12 = vector.broadcast %cst_5 : f32 to vector<64x128xf32>
    %13 = arith.mulf %12, %8 : vector<64x128xf32>
    %14 = arith.subf %11, %13 : vector<64x128xf32>
    %15 = tpu.iota {dimensions = array<i32: 0>} : vector<64x128xi32>
    %cst_6 = arith.constant dense<0x7F800000> : vector<128xf32>
    %16 = vector.multi_reduction <minimumf>, %14, %cst_6 [0] : vector<64x128xf32> to vector<128xf32>
    %17 = vector.shape_cast %16 : vector<128xf32> to vector<1x128xf32>
    %18 = vector.broadcast %17 : vector<1x128xf32> to vector<64x128xf32>
    %19 = arith.cmpf oeq, %14, %18 : vector<64x128xf32>
    %c64_i32 = arith.constant 64 : i32
    %20 = vector.broadcast %c64_i32 : i32 to vector<64x128xi32>
    %21 = arith.select %19, %15, %20 : vector<64x128xi1>, vector<64x128xi32>
    %cst_7 = arith.constant dense<2147483647> : vector<128xi32>
    %22 = vector.multi_reduction <minsi>, %21, %cst_7 [0] : vector<64x128xi32> to vector<128xi32>
    %23 = vector.shape_cast %22 : vector<128xi32> to vector<1x128xi32>
    %c0_8 = arith.constant 0 : index
    %c0_9 = arith.constant 0 : index
    %24 = vector.load %arg3[%c0_8, %c0_9] : memref<1x128xi32, #tpu.memory_space<vmem>>, vector<1x128xi32>
    tpu.vector_store %arg3[%c0_8, %c0_9], %23 {strides = array<i32>} : memref<1x128xi32, #tpu.memory_space<vmem>>, vector<1x128xi32>,
    %25 = vector.broadcast %23 : vector<1x128xi32> to vector<64x128xi32>
    %26 = arith.cmpi eq, %15, %25 : vector<64x128xi32>
    %27 = arith.extui %26 : vector<64x128xi1> to vector<64x128xi32>
    %28 = arith.sitofp %27 : vector<64x128xi32> to vector<64x128xf32>
    %cst_10 = arith.constant dense<0.000000e+00> : vector<32x128xf32>
    %29 = tpu.matmul %1, %28, %cst_10 {dimension_numbers = #tpu.dot_dimension_numbers<[0], [0], [1], [1], [0, 1, 1, 1], [], []>} : vector<64x32xf32>, vector<64x128xf32>, vector<32x128xf32> -> vector<32x128xf32>
    %c0_11 = arith.constant 0 : index
    %c0_12 = arith.constant 0 : index
    %30 = vector.load %arg4[%c0_11, %c0_12] : memref<32x128xf32, #tpu.memory_space<vmem>>, vector<32x128xf32>
    tpu.vector_store %arg4[%c0_11, %c0_12], %29 {strides = array<i32>} : memref<32x128xf32, #tpu.memory_space<vmem>>, vector<32x128xf32>,
    %31 = tpu.iota {dimensions = array<i32: 1>} : vector<1x128xi32>
    %c128_i32 = arith.constant 128 : i32
    %32 = arith.muli %arg0, %c128_i32 : i32
    %33 = vector.broadcast %32 : i32 to vector<1x128xi32>
    %34 = arith.addi %31, %33 : vector<1x128xi32>
    %c256_i32 = arith.constant 256 : i32
    %35 = vector.broadcast %c256_i32 : i32 to vector<1x128xi32>
    %36 = arith.cmpi slt, %34, %35 : vector<1x128xi32>
    %cst_13 = arith.constant 0.000000e+00 : f32
    %37 = vector.broadcast %cst_13 : f32 to vector<1x128xf32>
    %38 = arith.maximumf %17, %37 : vector<1x128xf32>
    %cst_14 = arith.constant 0.000000e+00 : f32
    %39 = vector.broadcast %cst_14 : f32 to vector<1x128xf32>
    %40 = arith.select %36, %38, %39 : vector<1x128xi1>, vector<1x128xf32>
    %cst_15 = arith.constant dense<0.000000e+00> : vector<1xf32>
    %41 = vector.multi_reduction <add>, %40, %cst_15 [1] : vector<1x128xf32> to vector<1xf32>
    %42 = vector.shape_cast %41 : vector<1xf32> to vector<1x1xf32>
    %c0_16 = arith.constant 0 : index
    %c0_17 = arith.constant 0 : index
    %c0_18 = arith.constant 0 : index
    %43 = vector.load %arg5[%c0_16, %c0_17, %c0_18] : memref<1x1x1xf32, #tpu.memory_space<vmem>>, vector<1x1x1xf32>
    %44 = vector.shape_cast %43 : vector<1x1x1xf32> to vector<1x1xf32>
    %45 = vector.shape_cast %42 : vector<1x1xf32> to vector<1x1x1xf32>
    tpu.vector_store %arg5[%c0_16, %c0_17, %c0_18], %45 {strides = array<i32>} : memref<1x1x1xf32, #tpu.memory_space<vmem>>, vector<1x1x1xf32>,
    %46 = tpu.transpose %14, [1, 0] : vector<64x128xf32> -> vector<128x64xf32>
    %c0_19 = arith.constant 0 : index
    %c0_20 = arith.constant 0 : index
    %47 = vector.load %arg6[%c0_19, %c0_20] : memref<128x64xf32, #tpu.memory_space<vmem>>, vector<128x64xf32>
    tpu.vector_store %arg6[%c0_19, %c0_20], %46 {strides = array<i32>} : memref<128x64xf32, #tpu.memory_space<vmem>>, vector<128x64xf32>,
    return
  }
  func.func @transform_0(%arg0: i32) -> (i32, i32) {
    %c0_i32 = arith.constant 0 : i32
    %c0_i32_0 = arith.constant 0 : i32
    return %c0_i32, %arg0 : i32, i32
  }
  func.func @transform_1(%arg0: i32) -> (i32, i32) {
    %c0_i32 = arith.constant 0 : i32
    %c0_i32_0 = arith.constant 0 : i32
    %c0_i32_1 = arith.constant 0 : i32
    return %c0_i32, %c0_i32_0 : i32, i32
  }
  func.func @transform_2(%arg0: i32) -> (i32, i32) {
    %c0_i32 = arith.constant 0 : i32
    %c0_i32_0 = arith.constant 0 : i32
    return %c0_i32, %arg0 : i32, i32
  }
  func.func @transform_3(%arg0: i32) -> (i32, i32) {
    %c0_i32 = arith.constant 0 : i32
    %c0_i32_0 = arith.constant 0 : i32
    return %c0_i32, %arg0 : i32, i32
  }
  func.func @transform_4(%arg0: i32) -> (i32, i32, i32) {
    %c0_i32 = arith.constant 0 : i32
    %c0_i32_0 = arith.constant 0 : i32
    %c0_i32_1 = arith.constant 0 : i32
    return %arg0, %c0_i32, %c0_i32_0 : i32, i32, i32
  }
  func.func @transform_5(%arg0: i32) -> (i32, i32) {
    %c0_i32 = arith.constant 0 : i32
    %c0_i32_0 = arith.constant 0 : i32
    return %arg0, %c0_i32 : i32, i32
  }
}

</mosaic_0001>

<llo_original>
// kernel: tpu_custom_call.1
$region0: #{tpu_custom_call.1}
  #allocation0 [shape = 'u32[]', space=smem, size = 0x4, offset = 0x4, fixed_abs, tag = 'smem constant byte address 0x4 - core index']
  #allocation1 [shape = 'u32[72,128]{1,0:T(1,128)}', space=vmem, size = 0x9000, scoped, tag = 'internal scratch']
  %s0 = inlined_call_operand.vmem [shape: f32[32,256], index: 0, kind: input, shape index: {}]
  %s1 = inlined_call_operand.vmem [shape: f32[64,32], index: 1, kind: input, shape index: {}]
  %s2 = inlined_call_operand.hbm [shape: s32[1,256], index: 2, kind: output, shape index: {0}]
  %s3 = inlined_call_operand.hbm [shape: f32[32,256], index: 3, kind: output, shape index: {1}]
  %s4 = inlined_call_operand.vmem [shape: f32[2,1,1], index: 4, kind: output, shape index: {2}]
  %s5 = inlined_call_operand.vmem [shape: f32[256,64], index: 5, kind: output, shape index: {3}]
  %6 = xla_tuple %s2, %s3, %s4, %s5
  %s7 = sld [smem:[#allocation0]]
  $region103: #{tpu_custom_call.1} parent=0
    _
  %s9 = ssub.s32 1, %s7
  %s10 = scalar_select 0, %s9, %s7
  $region1: #{tpu_custom_call.1} parent=0
    #allocation2 [shape = 'u8[32768]{0}', space=vmem, size = 0x8000, scoped, tag = 'input window, operand 0']
    #allocation3 [shape = 'u8[1024]{0}', space=vmem, size = 0x400, scoped, tag = 'output window, operand 0']
    #allocation4 [shape = 's32[2]{0}', space=sflag, size = 0x8, scoped, tag = 'scoped memory for tpu_custom_call.1']
    #allocation5 [shape = 'u8[32768]{0}', space=vmem, size = 0x8000, scoped, tag = 'output window, operand 1']
    #allocation6 [shape = 's32[2]{0}', space=sflag, size = 0x8, scoped, tag = 'scoped memory for tpu_custom_call.1']
    %11 = vsyncpa [#allocation4], 0
    %s12 = scalar_lea.sflag [#allocation4], 1
    %13 = vsyncpa %s12, 0
    %14 = vsyncpa [#allocation6], 0
    %s15 = scalar_lea.sflag [#allocation6], 1
    %16 = vsyncpa %s15, 0
    loop: start=0, step=1, limit=4
    $region2: #{tpu_custom_call.1} parent=1 // loop_pre_header
      _
    $region3: #{tpu_custom_call.1} parent=1 // loop_header
      %s18 = sphi 0, %s22
      %p19 = scmp.ge.s32.totalorder %s18, 4
      %s28 = sphi 0, %s30
      %s31 = sphi 0, %s28
      %s32 = sphi 0, %s31
      %s48 = sphi 0, %s32
      %s52 = sphi 0, %s52
      %s54 = sphi 0, %s52
      %s55 = sphi 0, %s54
      %s69 = sphi 0, %s55
      %s75 = sphi 0, %s77
      %s78 = sphi 0, %s75
      %s79 = sphi 0, %s78
      %s95 = sphi 0, %s79
      %s101 = sphi 0, %s103
      %s104 = sphi 0, %s101
      %s105 = sphi 0, %s104
      %s121 = sphi 0, %s105
      %s127 = sphi 0, %s129
      %s130 = sphi 0, %s127
      %s131 = sphi 0, %s130
      %s147 = sphi 0, %s131
      %s153 = sphi 0, %s155
      %s156 = sphi 0, %s153
      %s157 = sphi 0, %s156
      %s173 = sphi 0, %s157
    $region4: #{tpu_custom_call.1} parent=1 // loop_header_branch
      %21 = sbr.rel (%p19) target = $region8
    $region5: #{tpu_custom_call.1} parent=1 // loop_body
      %s23 = ssub.s32 %s18, 1
      %s24 = ssub.s32 %s18, 2
      %s25 = sadd.s32 %s18, 1
      %s26 = ssub.s32 %s18, %s25
      %p27 = scmp.eq.s32.totalorder %s26, 0
      %s29 = sadd.s32 %s28, 1
      %s30 = scalar_select %p27, %s28, %s29
      %p33 = pneg %p27
      %p34 = scmp.eq.s32.totalorder %s18, 1
      %p35 = por %p33, %p34
      %p36 = scmp.ne.s32.totalorder %s28, %s31
      %p37 = scmp.eq.s32.totalorder %s18, 0
      %p38 = por %p36, %p37
      %p39 = scmp.ne.s32.totalorder %s28, %s31
      %p40 = scmp.eq.s32.totalorder %s23, 1
      %p41 = por %p39, %p40
      %p42 = scmp.ne.s32.totalorder %s31, %s32
      %p43 = scmp.eq.s32.totalorder %s23, 0
      %p44 = por %p42, %p43
      %p45 = scmp.ne.s32.totalorder %s31, %s32
      %p46 = scmp.eq.s32.totalorder %s24, 1
      %p47 = por %p45, %p46
      %p49 = scmp.ne.s32.totalorder %s32, %s48
      %p50 = scmp.eq.s32.totalorder %s24, 0
      %p51 = por %p49, %p50
      %s53 = sadd.s32 %s52, 1
      %p56 = scmp.eq.s32.totalorder %s18, 1
      %p57 = scmp.ne.s32.totalorder %s52, %s54
      %p58 = scmp.eq.s32.totalorder %s18, 0
      %p59 = por %p57, %p58
      %p60 = scmp.ne.s32.totalorder %s52, %s54
      %p61 = scmp.eq.s32.totalorder %s23, 1
      %p62 = por %p60, %p61
      %p63 = scmp.ne.s32.totalorder %s54, %s55
      %p64 = scmp.eq.s32.totalorder %s23, 0
      %p65 = por %p63, %p64
      %p66 = scmp.ne.s32.totalorder %s54, %s55
      %p67 = scmp.eq.s32.totalorder %s24, 1
      %p68 = por %p66, %p67
      %p70 = scmp.ne.s32.totalorder %s55, %s69
      %p71 = scmp.eq.s32.totalorder %s24, 0
      %p72 = por %p70, %p71
      %s73 = ssub.s32 %s18, %s25
      %p74 = scmp.eq.s32.totalorder %s73, 0
      %s76 = sadd.s32 %s75, 1
      %s77 = scalar_select %p74, %s75, %s76
      %p80 = pneg %p74
      %p81 = scmp.eq.s32.totalorder %s18, 1
      %p82 = por %p80, %p81
      %p83 = scmp.ne.s32.totalorder %s75, %s78
      %p84 = scmp.eq.s32.totalorder %s18, 0
      %p85 = por %p83, %p84
      %p86 = scmp.ne.s32.totalorder %s75, %s78
      %p87 = scmp.eq.s32.totalorder %s23, 1
      %p88 = por %p86, %p87
      %p89 = scmp.ne.s32.totalorder %s78, %s79
      %p90 = scmp.eq.s32.totalorder %s23, 0
      %p91 = por %p89, %p90
      %p92 = scmp.ne.s32.totalorder %s78, %s79
      %p93 = scmp.eq.s32.totalorder %s24, 1
      %p94 = por %p92, %p93
      %p96 = scmp.ne.s32.totalorder %s79, %s95
      %p97 = scmp.eq.s32.totalorder %s24, 0
      %p98 = por %p96, %p97
      %s99 = ssub.s32 %s18, %s25
      %p100 = scmp.eq.s32.totalorder %s99, 0
      %s102 = sadd.s32 %s101, 1
      %s103 = scalar_select %p100, %s101, %s102
      %p106 = pneg %p100
      %p107 = scmp.eq.s32.totalorder %s18, 1
      %p108 = por %p106, %p107
      %p109 = scmp.ne.s32.totalorder %s101, %s104
      %p110 = scmp.eq.s32.totalorder %s18, 0
      %p111 = por %p109, %p110
      %p112 = scmp.ne.s32.totalorder %s101, %s104
      %p113 = scmp.eq.s32.totalorder %s23, 1
      %p114 = por %p112, %p113
      %p115 = scmp.ne.s32.totalorder %s104, %s105
      %p116 = scmp.eq.s32.totalorder %s23, 0
      %p117 = por %p115, %p116
      %p118 = scmp.ne.s32.totalorder %s104, %s105
      %p119 = scmp.eq.s32.totalorder %s24, 1
      %p120 = por %p118, %p119
      %p122 = scmp.ne.s32.totalorder %s105, %s121
      %p123 = scmp.eq.s32.totalorder %s24, 0
      %p124 = por %p122, %p123
      %s125 = ssub.s32 %s18, %s25
      %p126 = scmp.eq.s32.totalorder %s125, 0
      %s128 = sadd.s32 %s127, 1
      %s129 = scalar_select %p126, %s127, %s128
      %p132 = pneg %p126
      %p133 = scmp.eq.s32.totalorder %s18, 1
      %p134 = por %p132, %p133
      %p135 = scmp.ne.s32.totalorder %s127, %s130
      %p136 = scmp.eq.s32.totalorder %s18, 0
      %p137 = por %p135, %p136
      %p138 = scmp.ne.s32.totalorder %s127, %s130
      %p139 = scmp.eq.s32.totalorder %s23, 1
      %p140 = por %p138, %p139
      %p141 = scmp.ne.s32.totalorder %s130, %s131
      %p142 = scmp.eq.s32.totalorder %s23, 0
      %p143 = por %p141, %p142
      %p144 = scmp.ne.s32.totalorder %s130, %s131
      %p145 = scmp.eq.s32.totalorder %s24, 1
      %p146 = por %p144, %p145
      %p148 = scmp.ne.s32.totalorder %s131, %s147
      %p149 = scmp.eq.s32.totalorder %s24, 0
      %p150 = por %p148, %p149
      %s151 = ssub.s32 %s18, %s25
      %p152 = scmp.eq.s32.totalorder %s151, 0
      %s154 = sadd.s32 %s153, 1
      %s155 = scalar_select %p152, %s153, %s154
      %p158 = pneg %p152
      %p159 = scmp.eq.s32.totalorder %s18, 1
      %p160 = por %p158, %p159
      %p161 = scmp.ne.s32.totalorder %s153, %s156
      %p162 = scmp.eq.s32.totalorder %s18, 0
      %p163 = por %p161, %p162
      %p164 = scmp.ne.s32.totalorder %s153, %s156
      %p165 = scmp.eq.s32.totalorder %s23, 1
      %p166 = por %p164, %p165
      %p167 = scmp.ne.s32.totalorder %s156, %s157
      %p168 = scmp.eq.s32.totalorder %s23, 0
      %p169 = por %p167, %p168
      %p170 = scmp.ne.s32.totalorder %s156, %s157
      %p171 = scmp.eq.s32.totalorder %s24, 1
      %p172 = por %p170, %p171
      %p174 = scmp.ne.s32.totalorder %s157, %s173
      %p175 = scmp.eq.s32.totalorder %s24, 0
      %p176 = por %p174, %p175
      %p177 = scmp.le.s32.totalorder 1, %s18
      %p178 = scmp.lt.s32.totalorder %s18, 3
      %p179 = pnand %p177, %p178
      %p180 = pneg %p179
      // Predicated region
      $region9: #{tpu_custom_call.1} parent=5 // pred_check
        _
      $region10: #{tpu_custom_call.1} parent=5 // pred_check_branch
        %182 = sbr.rel (%p179) target = $region12
      $region11: #{tpu_custom_call.1} parent=5 // pred_region
        %s183 = ssub.s32 %s18, 1
        // Predicated region
        $region13: #{tpu_custom_call.1} parent=11 // pred_check
          %p184 = pneg %p65
        $region14: #{tpu_custom_call.1} parent=11 // pred_check_branch
          %186 = sbr.rel (%p184) target = $region16
        $region15: #{tpu_custom_call.1} parent=11 // pred_region
          _
        $region16: #{tpu_custom_call.1} parent=11 // pred_fallthru
          _
      $region12: #{tpu_custom_call.1} parent=5 // pred_fallthru
        _
      %p187 = scmp.lt.s32.totalorder %s18, 2
      // Predicated region
      $region17: #{tpu_custom_call.1} parent=5 // pred_check
        %p188 = pneg %p187
      $region18: #{tpu_custom_call.1} parent=5 // pred_check_branch
        %190 = sbr.rel (%p188) target = $region20
      $region19: #{tpu_custom_call.1} parent=5 // pred_region
        // Predicated region
        $region21: #{tpu_custom_call.1} parent=19 // pred_check
          %p191 = pneg %p38
        $region22: #{tpu_custom_call.1} parent=19 // pred_check_branch
          %193 = sbr.rel (%p191) target = $region24
        $region23: #{tpu_custom_call.1} parent=19 // pred_region
          %s194 = sand.u32 %s28, 1
          %s195 = sand.u32 %s28, 1
          %s196 = smul.addr %s195, 32
          %s197 = scalar_lea.vmem [#allocation2], %s196
          %s198 = smul.addr %s18, 8
          %s199 = scalar_lea.vmem %s0, %s198
          // Predicated region
          $region25: #{tpu_custom_call.1} parent=23 // pred_check
            _
          $region26: #{tpu_custom_call.1} parent=23 // pred_check_branch
            %201 = sbr.rel (0) target = $region28
          $region27: #{tpu_custom_call.1} parent=23 // pred_region
            // Predicated region
            $region29: #{tpu_custom_call.1} parent=27 // pred_check
              _
            $region30: #{tpu_custom_call.1} parent=27 // pred_check_branch
              %203 = sbr.rel (0) target = $region32
            $region31: #{tpu_custom_call.1} parent=27 // pred_region
              // Predicated region
              $region44: #{tpu_custom_call.1} parent=31 // pred_check
                _
              $region45: #{tpu_custom_call.1} parent=31 // pred_check_branch
                %225 = sbr.rel (0) target = $region47
              $region46: #{tpu_custom_call.1} parent=31 // pred_region
                loop: start=0, step=1, limit=1
                $region48: #{tpu_custom_call.1} parent=46 // loop_pre_header
                  _
                $region49: #{tpu_custom_call.1} parent=46 // loop_header
                  %s227 = sphi 0, %s231
                  %p228 = scmp.ge.s32.totalorder %s227, 1
                  %s232 = sphi %s199, %s199
                  %s233 = sphi %s197, %s197
                $region50: #{tpu_custom_call.1} parent=46 // loop_header_branch
                  %230 = sbr.rel (%p228) target = $region54
                $region51: #{tpu_custom_call.1} parent=46 // loop_body
                  %v234 = vld [vmem:[%s232] sm:$0xff]
                  %235 = vst [vmem:[%s233] sm:$0xff] %v234
                  %v236 = vld [vmem:[%s232 + $0x10] sm:$0xff]
                  %237 = vst [vmem:[%s233 + $0x8] sm:$0xff] %v236
                  %v238 = vld [vmem:[%s232 + $0x20] sm:$0xff]
                  %239 = vst [vmem:[%s233 + $0x10] sm:$0xff] %v238
                  %v240 = vld [vmem:[%s232 + $0x30] sm:$0xff]
                  %241 = vst [vmem:[%s233 + $0x18] sm:$0xff] %v240
                $region52: #{tpu_custom_call.1} parent=46 // loop_footer
                  %s231 = sadd.s32 1, %s227
                $region53: #{tpu_custom_call.1} parent=46 // loop_footer_branch
                  %226 = sbr.rel target = $region49
                $region54: #{tpu_custom_call.1} parent=46 // loop_exit
                  _
              $region47: #{tpu_custom_call.1} parent=31 // pred_fallthru
                _
              // Predicated region
              $region55: #{tpu_custom_call.1} parent=31 // pred_check
                _
              $region56: #{tpu_custom_call.1} parent=31 // pred_check_branch
                %243 = sbr.rel target = $region58
              $region57: #{tpu_custom_call.1} parent=31 // pred_region
                _
              $region58: #{tpu_custom_call.1} parent=31 // pred_fallthru
                _
            $region32: #{tpu_custom_call.1} parent=27 // pred_fallthru
              _
            // Predicated region
            $region33: #{tpu_custom_call.1} parent=27 // pred_check
              _
            $region34: #{tpu_custom_call.1} parent=27 // pred_check_branch
              %205 = sbr.rel target = $region36
            $region35: #{tpu_custom_call.1} parent=27 // pred_region
              %s207 = ssub.s32 256, 1
              loop: start=0, step=1, limit=1
              $region37: #{tpu_custom_call.1} parent=35 // loop_pre_header
                _
              $region38: #{tpu_custom_call.1} parent=35 // loop_header
                %s209 = sphi 0, %s213
                %p210 = scmp.ge.s32.totalorder %s209, 1
                %s214 = sphi %s199, %s199
                %s215 = sphi %s197, %s197
              $region39: #{tpu_custom_call.1} parent=35 // loop_header_branch
                %212 = sbr.rel (%p210) target = $region43
              $region40: #{tpu_custom_call.1} parent=35 // loop_body
                %v216 = vld [vmem:[%s214] sm:%s207]
                %217 = vst [vmem:[%s215] sm:%s207] %v216
                %v218 = vld [vmem:[%s214 + $0x10] sm:%s207]
                %219 = vst [vmem:[%s215 + $0x8] sm:%s207] %v218
                %v220 = vld [vmem:[%s214 + $0x20] sm:%s207]
                %221 = vst [vmem:[%s215 + $0x10] sm:%s207] %v220
                %v222 = vld [vmem:[%s214 + $0x30] sm:%s207]
                %223 = vst [vmem:[%s215 + $0x18] sm:%s207] %v222
              $region41: #{tpu_custom_call.1} parent=35 // loop_footer
                %s213 = sadd.s32 1, %s209
              $region42: #{tpu_custom_call.1} parent=35 // loop_footer_branch
                %208 = sbr.rel target = $region38
              $region43: #{tpu_custom_call.1} parent=35 // loop_exit
                _
            $region36: #{tpu_custom_call.1} parent=27 // pred_fallthru
              _
          $region28: #{tpu_custom_call.1} parent=23 // pred_fallthru
            _
          %244 = vnop
        $region24: #{tpu_custom_call.1} parent=19 // pred_fallthru
          _
      $region20: #{tpu_custom_call.1} parent=5 // pred_fallthru
        _
      %p245 = scmp.le.s32.totalorder 1, %s18
      %p246 = scmp.lt.s32.totalorder %s18, 3
      %p247 = pnand %p245, %p246
      %p248 = pneg %p247
      // Predicated region
      $region59: #{tpu_custom_call.1} parent=5 // pred_check
        _
      $region60: #{tpu_custom_call.1} parent=5 // pred_check_branch
        %250 = sbr.rel (%p247) target = $region62
      $region61: #{tpu_custom_call.1} parent=5 // pred_region
        %s251 = ssub.s32 %s18, 1
        %s252 = sand.u32 %s31, 1
        %s253 = sand.u32 %s31, 1
        %s254 = smul.addr %s253, 32
        %s255 = scalar_lea.vmem [#allocation2], %s254
        // Predicated region
        $region63: #{tpu_custom_call.1} parent=61 // pred_check
          %p256 = pneg %p44
        $region64: #{tpu_custom_call.1} parent=61 // pred_check_branch
          %258 = sbr.rel (%p256) target = $region66
        $region65: #{tpu_custom_call.1} parent=61 // pred_region
          _
        $region66: #{tpu_custom_call.1} parent=61 // pred_fallthru
          _
        %s259 = sand.u32 %s31, 1
        %s260 = sand.u32 %s31, 1
        %s261 = smul.addr %s260, 32
        %s262 = scalar_lea.vmem [#allocation2], %s261
        %p263 = pneg %p44
        %p264 = pneg %p41
        %p265 = pneg %p65
        %p266 = pneg %p62
        %p267 = pneg %p91
        %p268 = pneg %p88
        %s269 = sand.u32 %s78, 1
        %s270 = scalar_lea.sflag [#allocation4], %s269
        %s271 = sand.u32 %s78, 1
        %s272 = scalar_lea.vmem [#allocation3], %s271
        %p273 = pneg %p117
        %p274 = pneg %p114
        %s275 = sand.u32 %s104, 1
        %s276 = scalar_lea.sflag [#allocation6], %s275
        %s277 = sand.u32 %s104, 1
        %s278 = smul.addr %s277, 32
        %s279 = scalar_lea.vmem [#allocation5], %s278
        %p280 = pneg %p143
        %p281 = pneg %p140
        %p282 = scmp.lt.s32.totalorder %s23, 1
        %s283 = scalar_select %p282, %s23, 1
        %s284 = scalar_lea.vmem %s4, %s283
        %p285 = pneg %p169
        %p286 = pneg %p166
        %s287 = smul.u32 16, %s23
        %p288 = scmp.lt.s32.totalorder %s287, 31
        %s289 = scalar_select %p288, %s287, 31
        %s290 = smul.addr %s289, 8
        %s291 = scalar_lea.vmem %s5, %s290
        %p292 = scmp.lt.s32.totalorder %s23, 1
        %s293 = scalar_select %p292, %s23, 1
        %s294 = scalar_lea.vmem %s4, %s293
        %s295 = smul.u32 16, %s23
        %p296 = scmp.lt.s32.totalorder %s295, 31
        %s297 = scalar_select %p296, %s295, 31
        %s298 = smul.addr %s297, 8
        %s299 = scalar_lea.vmem %s5, %s298
        %s300 = smul.u32 16, %s23
        %v301 = vld [vmem:[%s255] sm:$0xff]
        %v302 = vld [vmem:[%s255 + $0x8] sm:$0xff]
        %v303 = vld [vmem:[%s255 + $0x10] sm:$0xff]
        %v304 = vld [vmem:[%s255 + $0x18] sm:$0xff]
        %v305 = vld [vmem:[%s1] sm:$0xff]
        %v306 = vld [vmem:[%s1 + $0x8] sm:$0xff]
        %v307 = vld [vmem:[%s1 + $0x10] sm:$0xff]
        %v308 = vld [vmem:[%s1 + $0x18] sm:$0xff]
        %v309 = vld [vmem:[%s1 + $0x20] sm:$0xff]
        %v310 = vld [vmem:[%s1 + $0x28] sm:$0xff]
        %v311 = vld [vmem:[%s1 + $0x30] sm:$0xff]
        %v312 = vld [vmem:[%s1 + $0x38] sm:$0xff]
        %v313 = vmul.f32 %v305, %v305
        %v314 = vmul.f32 %v306, %v306
        %v315 = vmul.f32 %v307, %v307
        %v316 = vmul.f32 %v308, %v308
        %v317 = vmul.f32 %v309, %v309
        %v318 = vmul.f32 %v310, %v310
        %v319 = vmul.f32 %v311, %v311
        %v320 = vmul.f32 %v312, %v312
        %vm321 = vcmask 261120
        %v322 = vsel %vm321, %v313, 0.0
        %323 = vadd.xlane.f32.xlu0 %v322
        %v324 = vpop.xlane.xlu0 %323
        %v325 = vsel %vm321, %v314, 0.0
        %326 = vadd.xlane.f32.xlu0 %v325
        %v327 = vpop.xlane.xlu0 %326
        %v328 = vsel %vm321, %v315, 0.0
        %329 = vadd.xlane.f32.xlu0 %v328
        %v330 = vpop.xlane.xlu0 %329
        %v331 = vsel %vm321, %v316, 0.0
        %332 = vadd.xlane.f32.xlu0 %v331
        %v333 = vpop.xlane.xlu0 %332
        %v334 = vsel %vm321, %v317, 0.0
        %335 = vadd.xlane.f32.xlu0 %v334
        %v336 = vpop.xlane.xlu0 %335
        %v337 = vsel %vm321, %v318, 0.0
        %338 = vadd.xlane.f32.xlu0 %v337
        %v339 = vpop.xlane.xlu0 %338
        %v340 = vsel %vm321, %v319, 0.0
        %341 = vadd.xlane.f32.xlu0 %v340
        %v342 = vpop.xlane.xlu0 %341
        %v343 = vsel %vm321, %v320, 0.0
        %344 = vadd.xlane.f32.xlu0 %v343
        %v345 = vpop.xlane.xlu0 %344
        %v346 = vmul.f32 %v301, %v301
        %v347 = vmul.f32 %v302, %v302
        %v348 = vmul.f32 %v303, %v303
        %v349 = vmul.f32 %v304, %v304
        %v350 = vadd.f32 %v346, %v347
        %v351 = vadd.f32 %v350, %v348
        %v352 = vadd.f32 %v351, %v349
        %v353 = vrot.slane %v352, 4
        %v354 = vadd.f32 %v352, %v353
        %v355 = vrot.slane %v354, 2
        %v356 = vadd.f32 %v354, %v355
        %v357 = vrot.slane %v356, 1
        %v358 = vadd.f32 %v356, %v357
        %v360 = vsel %vm321, %v305, 0
        %v363 = vsel %vm321, %v306, 0
        %v366 = vsel %vm321, %v307, 0
        %v369 = vsel %vm321, %v308, 0
        %v372 = vsel %vm321, %v309, 0
        %v375 = vsel %vm321, %v310, 0
        %v378 = vsel %vm321, %v311, 0
        %v381 = vsel %vm321, %v312, 0
        %383 = vmatpush.msra.mxu0 0.0
        %384 = vmatpush.msra.mxu0 0.0
        %385 = vmatpush.msra.mxu0 0.0
        %386 = vmatpush.msra.mxu0 0.0
        %387 = vmatpush.msra.mxu0 0.0
        %388 = vmatpush.msra.mxu0 0.0
        %389 = vmatpush.msra.mxu0 0.0
        %390 = vmatpush.msra.mxu0 0.0
        %391 = vmatpush.msra.mxu0 0.0
        %392 = vmatpush.msra.mxu0 0.0
        %393 = vmatpush.msra.mxu0 0.0
        %394 = vmatpush.msra.mxu0 0.0
        %395 = vmatpush.msra.mxu0 %v304
        %396 = vmatpush.msra.mxu0 %v303
        %397 = vmatpush.msra.mxu0 %v302
        %398 = vmatpush.msra.mxu0 %v301
        %399 = vmatmul.f32.gmra.mxu0 %v360
        %v400 = vpop.f32.mrf.mxu0
        %v401 = vadd.f32 0.0, %v400
        %402 = vmatmul.f32.gmra.mxu0 %v363
        %v403 = vpop.f32.mrf.mxu0
        %v404 = vadd.f32 0.0, %v403
        %405 = vmatmul.f32.gmra.mxu0 %v366
        %v406 = vpop.f32.mrf.mxu0
        %v407 = vadd.f32 0.0, %v406
        %408 = vmatmul.f32.gmra.mxu0 %v369
        %v409 = vpop.f32.mrf.mxu0
        %v410 = vadd.f32 0.0, %v409
        %411 = vmatmul.f32.gmra.mxu0 %v372
        %v412 = vpop.f32.mrf.mxu0
        %v413 = vadd.f32 0.0, %v412
        %414 = vmatmul.f32.gmra.mxu0 %v375
        %v415 = vpop.f32.mrf.mxu0
        %v416 = vadd.f32 0.0, %v415
        %417 = vmatmul.f32.gmra.mxu0 %v378
        %v418 = vpop.f32.mrf.mxu0
        %v419 = vadd.f32 0.0, %v418
        %420 = vmatmul.f32.gmra.mxu0 %v381
        %v421 = vpop.f32.mrf.mxu0
        %v422 = vadd.f32 0.0, %v421
        %423 = vdwg.mxu0
        %v424 = vadd.f32 %v358, %v324
        %v425 = vadd.f32 %v358, %v327
        %v426 = vadd.f32 %v358, %v330
        %v427 = vadd.f32 %v358, %v333
        %v428 = vadd.f32 %v358, %v336
        %v429 = vadd.f32 %v358, %v339
        %v430 = vadd.f32 %v358, %v342
        %v431 = vadd.f32 %v358, %v345
        %v432 = vmul.f32 %v401, 2.0
        %v433 = vmul.f32 %v404, 2.0
        %v434 = vmul.f32 %v407, 2.0
        %v435 = vmul.f32 %v410, 2.0
        %v436 = vmul.f32 %v413, 2.0
        %v437 = vmul.f32 %v416, 2.0
        %v438 = vmul.f32 %v419, 2.0
        %v439 = vmul.f32 %v422, 2.0
        %v440 = vsub.f32 %v424, %v432
        %v441 = vsub.f32 %v425, %v433
        %v442 = vsub.f32 %v426, %v434
        %v443 = vsub.f32 %v427, %v435
        %v444 = vsub.f32 %v428, %v436
        %v445 = vsub.f32 %v429, %v437
        %v446 = vsub.f32 %v430, %v438
        %v447 = vsub.f32 %v431, %v439
        %v448 = vlaneseq
        %v449 = vshrl.u32 %v448, 7
        %v450 = vadd.s32 %v449, 8
        %v451 = vadd.s32 %v449, 16
        %v452 = vadd.s32 %v449, 24
        %v453 = vadd.s32 %v449, 32
        %v454 = vadd.s32 %v449, 40
        %v455 = vadd.s32 %v449, 48
        %v456 = vadd.s32 %v449, 56
        %v457 = vmin.f32 %v440, %v444
        %v458 = vmin.f32 %v441, %v445
        %v459 = vmin.f32 %v442, %v446
        %v460 = vmin.f32 %v443, %v447
        %v461 = vmin.f32 %v457, %v458
        %v462 = vmin.f32 %v459, %v460
        %v463 = vmin.f32 %v461, %v462
        %v464 = vrot.slane %v463, 4
        %v465 = vmin.f32 %v463, %v464
        %v466 = vrot.slane %v465, 2
        %v467 = vmin.f32 %v465, %v466
        %v468 = vrot.slane %v467, 1
        %v469 = vmin.f32 %v467, %v468
        %vm470 = vcmp.eq.f32.partialorder %v440, %v469
        %vm471 = vcmp.eq.f32.partialorder %v441, %v469
        %vm472 = vcmp.eq.f32.partialorder %v442, %v469
        %vm473 = vcmp.eq.f32.partialorder %v443, %v469
        %vm474 = vcmp.eq.f32.partialorder %v444, %v469
        %vm475 = vcmp.eq.f32.partialorder %v445, %v469
        %vm476 = vcmp.eq.f32.partialorder %v446, %v469
        %vm477 = vcmp.eq.f32.partialorder %v447, %v469
        %v478 = vsel %vm470, %v449, 64
        %v479 = vsel %vm471, %v450, 64
        %v480 = vsel %vm472, %v451, 64
        %v481 = vsel %vm473, %v452, 64
        %v482 = vsel %vm474, %v453, 64
        %v483 = vsel %vm475, %v454, 64
        %v484 = vsel %vm476, %v455, 64
        %v485 = vsel %vm477, %v456, 64
        %vm486 = vcmp.lt.s32.totalorder %v478, %v482
        %v487 = vsel %vm486, %v478, %v482
        %vm488 = vcmp.lt.s32.totalorder %v479, %v483
        %v489 = vsel %vm488, %v479, %v483
        %vm490 = vcmp.lt.s32.totalorder %v480, %v484
        %v491 = vsel %vm490, %v480, %v484
        %vm492 = vcmp.lt.s32.totalorder %v481, %v485
        %v493 = vsel %vm492, %v481, %v485
        %vm494 = vcmp.lt.s32.totalorder %v487, %v489
        %v495 = vsel %vm494, %v487, %v489
        %vm496 = vcmp.lt.s32.totalorder %v491, %v493
        %v497 = vsel %vm496, %v491, %v493
        %vm498 = vcmp.lt.s32.totalorder %v495, %v497
        %v499 = vsel %vm498, %v495, %v497
        %v500 = vrot.slane %v499, 4
        %vm501 = vcmp.lt.s32.totalorder %v499, %v500
        %v502 = vsel %vm501, %v499, %v500
        %v503 = vrot.slane %v502, 2
        %vm504 = vcmp.lt.s32.totalorder %v502, %v503
        %v505 = vsel %vm504, %v502, %v503
        %v506 = vrot.slane %v505, 1
        %vm507 = vcmp.lt.s32.totalorder %v505, %v506
        %v508 = vsel %vm507, %v505, %v506
        %509 = vst [vmem:[%s272] sm:$0x1] %v508
        %vm510 = vcmp.eq.s32.totalorder %v449, %v508
        %vm511 = vcmp.eq.s32.totalorder %v450, %v508
        %vm512 = vcmp.eq.s32.totalorder %v451, %v508
        %vm513 = vcmp.eq.s32.totalorder %v452, %v508
        %vm514 = vcmp.eq.s32.totalorder %v453, %v508
        %vm515 = vcmp.eq.s32.totalorder %v454, %v508
        %vm516 = vcmp.eq.s32.totalorder %v455, %v508
        %vm517 = vcmp.eq.s32.totalorder %v456, %v508
        %v518 = vsel %vm510, 1, 0
        %v519 = vsel %vm511, 1, 0
        %v520 = vsel %vm512, 1, 0
        %v521 = vsel %vm513, 1, 0
        %v522 = vsel %vm514, 1, 0
        %v523 = vsel %vm515, 1, 0
        %v524 = vsel %vm516, 1, 0
        %v525 = vsel %vm517, 1, 0
        %v526 = vcvt.s32.f32 %v518
        %v527 = vcvt.s32.f32 %v519
        %v528 = vcvt.s32.f32 %v520
        %v529 = vcvt.s32.f32 %v521
        %v530 = vcvt.s32.f32 %v522
        %v531 = vcvt.s32.f32 %v523
        %v532 = vcvt.s32.f32 %v524
        %v533 = vcvt.s32.f32 %v525
        %534 = vxpose.xlu0.b32.start [1/16] %v305, 128
        %535 = vxpose.xlu0.b32.cont [2/16] %v306, 128
        %536 = vxpose.xlu0.b32.cont [3/16] %v307, 128
        %537 = vxpose.xlu0.b32.cont [4/16] %v308, 128
        %538 = vxpose.xlu0.b32.cont [5/16] %v309, 128
        %539 = vxpose.xlu0.b32.cont [6/16] %v310, 128
        %540 = vxpose.xlu0.b32.cont [7/16] %v311, 128
        %541 = vxpose.xlu0.b32.cont [8/16] %v312, 128
        %542 = vxpose.xlu0.b32.cont [9/16] 0.0, 128
        %543 = vxpose.xlu0.b32.cont [10/16] 0.0, 128
        %544 = vxpose.xlu0.b32.cont [11/16] 0.0, 128
        %545 = vxpose.xlu0.b32.cont [12/16] 0.0, 128
        %546 = vxpose.xlu0.b32.cont [13/16] 0.0, 128
        %547 = vxpose.xlu0.b32.cont [14/16] 0.0, 128
        %548 = vxpose.xlu0.b32.cont [15/16] 0.0, 128
        %549 = vxpose.xlu0.b32.end [16/16] 0.0, 128
        %v550 = vpop.trf.xlu0
        %v551 = vpop.trf.xlu0
        %v552 = vpop.trf.xlu0
        %v553 = vpop.trf.xlu0
        %v554 = vpop.trf.xlu0
        %v555 = vpop.trf.xlu0
        %v556 = vpop.trf.xlu0
        %v557 = vpop.trf.xlu0
        %v558 = vpop.trf.xlu0
        %v559 = vpop.trf.xlu0
        %v560 = vpop.trf.xlu0
        %v561 = vpop.trf.xlu0
        %v562 = vpop.trf.xlu0
        %v563 = vpop.trf.xlu0
        %v564 = vpop.trf.xlu0
        %v565 = vpop.trf.xlu0
        %vm566 = vcmask 523264
        %v568 = vsel %vm566, %v550, 0
        %v571 = vsel %vm566, %v551, 0
        %v574 = vsel %vm566, %v552, 0
        %v577 = vsel %vm566, %v553, 0
        %579 = vmatpush.msra.mxu0 0.0
        %580 = vmatpush.msra.mxu0 0.0
        %581 = vmatpush.msra.mxu0 0.0
        %582 = vmatpush.msra.mxu0 0.0
        %583 = vmatpush.msra.mxu0 0.0
        %584 = vmatpush.msra.mxu0 0.0
        %585 = vmatpush.msra.mxu0 0.0
        %586 = vmatpush.msra.mxu0 0.0
        %587 = vmatpush.msra.mxu0 %v533
        %588 = vmatpush.msra.mxu0 %v532
        %589 = vmatpush.msra.mxu0 %v531
        %590 = vmatpush.msra.mxu0 %v530
        %591 = vmatpush.msra.mxu0 %v529
        %592 = vmatpush.msra.mxu0 %v528
        %593 = vmatpush.msra.mxu0 %v527
        %594 = vmatpush.msra.mxu0 %v526
        %595 = vmatmul.f32.gmra.mxu0 %v568
        %v596 = vpop.f32.mrf.mxu0
        %v597 = vadd.f32 0.0, %v596
        %598 = vmatmul.f32.gmra.mxu0 %v571
        %v599 = vpop.f32.mrf.mxu0
        %v600 = vadd.f32 0.0, %v599
        %601 = vmatmul.f32.gmra.mxu0 %v574
        %v602 = vpop.f32.mrf.mxu0
        %v603 = vadd.f32 0.0, %v602
        %604 = vmatmul.f32.gmra.mxu0 %v577
        %v605 = vpop.f32.mrf.mxu0
        %v606 = vadd.f32 0.0, %v605
        %607 = vdwg.mxu0
        %608 = vst [vmem:[%s279] sm:$0xff] %v597
        %609 = vst [vmem:[%s279 + $0x8] sm:$0xff] %v600
        %610 = vst [vmem:[%s279 + $0x10] sm:$0xff] %v603
        %611 = vst [vmem:[%s279 + $0x18] sm:$0xff] %v606
        %v612 = vlaneseq
        %v613 = vand.u32 %v612, 127
        %s614 = smul.u32 %s23, 128
        %v615 = vstv %s614
        %v616 = vadd.s32 %v613, %v615
        %vm617 = vcmp.lt.s32.totalorder %v616, 256
        %v618 = vmax.f32 %v469, 0.0
        %v619 = vsel %vm617, %v618, 0.0
        %620 = vadd.xlane.f32.xlu0 %v619
        %v621 = vpop.xlane.xlu0 %620
        %vm622 = vcmask 0
        %623 = vst.msk [vmem:[%s294] sm:$0x1] %vm622, %v621
        %624 = vxpose.xlu0.b32.start [1/16] %v440, 128
        %625 = vxpose.xlu0.b32.cont [2/16] %v441, 128
        %626 = vxpose.xlu0.b32.cont [3/16] %v442, 128
        %627 = vxpose.xlu0.b32.cont [4/16] %v443, 128
        %628 = vxpose.xlu0.b32.cont [5/16] %v444, 128
        %629 = vxpose.xlu0.b32.cont [6/16] %v445, 128
        %630 = vxpose.xlu0.b32.cont [7/16] %v446, 128
        %631 = vxpose.xlu0.b32.cont [8/16] %v447, 128
        %632 = vxpose.xlu0.b32.cont [9/16] 0.0, 128
        %633 = vxpose.xlu0.b32.cont [10/16] 0.0, 128
        %634 = vxpose.xlu0.b32.cont [11/16] 0.0, 128
        %635 = vxpose.xlu0.b32.cont [12/16] 0.0, 128
        %636 = vxpose.xlu0.b32.cont [13/16] 0.0, 128
        %637 = vxpose.xlu0.b32.cont [14/16] 0.0, 128
        %638 = vxpose.xlu0.b32.cont [15/16] 0.0, 128
        %639 = vxpose.xlu0.b32.end [16/16] 0.0, 128
        %v640 = vpop.trf.xlu0
        %v641 = vpop.trf.xlu0
        %v642 = vpop.trf.xlu0
        %v643 = vpop.trf.xlu0
        %v644 = vpop.trf.xlu0
        %v645 = vpop.trf.xlu0
        %v646 = vpop.trf.xlu0
        %v647 = vpop.trf.xlu0
        %v648 = vpop.trf.xlu0
        %v649 = vpop.trf.xlu0
        %v650 = vpop.trf.xlu0
        %v651 = vpop.trf.xlu0
        %v652 = vpop.trf.xlu0
        %v653 = vpop.trf.xlu0
        %v654 = vpop.trf.xlu0
        %v655 = vpop.trf.xlu0
        %656 = vst.msk [vmem:[%s299] sm:$0xff] %vm566, %v640
        %657 = vst.msk [vmem:[%s299 + $0x8] sm:$0xff] %vm566, %v641
        %658 = vst.msk [vmem:[%s299 + $0x10] sm:$0xff] %vm566, %v642
        %659 = vst.msk [vmem:[%s299 + $0x18] sm:$0xff] %vm566, %v643
        %660 = vst.msk [vmem:[%s299 + $0x20] sm:$0xff] %vm566, %v644
        %661 = vst.msk [vmem:[%s299 + $0x28] sm:$0xff] %vm566, %v645
        %662 = vst.msk [vmem:[%s299 + $0x30] sm:$0xff] %vm566, %v646
        %663 = vst.msk [vmem:[%s299 + $0x38] sm:$0xff] %vm566, %v647
        %664 = vst.msk [vmem:[%s299 + $0x40] sm:$0xff] %vm566, %v648
        %665 = vst.msk [vmem:[%s299 + $0x48] sm:$0xff] %vm566, %v649
        %666 = vst.msk [vmem:[%s299 + $0x50] sm:$0xff] %vm566, %v650
        %667 = vst.msk [vmem:[%s299 + $0x58] sm:$0xff] %vm566, %v651
        %668 = vst.msk [vmem:[%s299 + $0x60] sm:$0xff] %vm566, %v652
        %669 = vst.msk [vmem:[%s299 + $0x68] sm:$0xff] %vm566, %v653
        %670 = vst.msk [vmem:[%s299 + $0x70] sm:$0xff] %vm566, %v654
        %671 = vst.msk [vmem:[%s299 + $0x78] sm:$0xff] %vm566, %v655
        %s672 = sand.u32 %s78, 1
        %s673 = scalar_lea.sflag [#allocation4], %s672
        %s674 = sand.u32 %s78, 1
        %s675 = scalar_lea.vmem [#allocation3], %s674
        %s676 = sand.u32 %s104, 1
        %s677 = scalar_lea.sflag [#allocation6], %s676
        %s678 = sand.u32 %s104, 1
        %s679 = smul.addr %s678, 32
        %s680 = scalar_lea.vmem [#allocation5], %s679
        %p681 = scmp.lt.s32.totalorder %s23, 1
        %s682 = scalar_select %p681, %s23, 1
        %s683 = scalar_lea.vmem %s4, %s682
        %s684 = smul.u32 16, %s23
        %p685 = scmp.lt.s32.totalorder %s684, 31
        %s686 = scalar_select %p685, %s684, 31
        %s687 = smul.addr %s686, 8
        %s688 = scalar_lea.vmem %s5, %s687
        // Predicated region
        $region67: #{tpu_custom_call.1} parent=61 // pred_check
          %p689 = pneg %p88
        $region68: #{tpu_custom_call.1} parent=61 // pred_check_branch
          %691 = sbr.rel (%p689) target = $region70
        $region69: #{tpu_custom_call.1} parent=61 // pred_region
          %693 = vsyncadd %s673, 0
          %s694 = scalar_lea.hbm %s2, %s23
          %s696 = sshll.u32 %s675, 4
          %s697 = int_to_ptr.vmem [resolvable:$true] %s696
          %s698 = sshll.u32 %s694, 4
          %s699 = int_to_ptr.hbm [resolvable:$true] %s698
          %701 = dma.vmem_to_hbm [thread:$0]  %s697, 16, %s699, %s673
        $region70: #{tpu_custom_call.1} parent=61 // pred_fallthru
          _
        // Predicated region
        $region71: #{tpu_custom_call.1} parent=61 // pred_check
          %p702 = pneg %p114
        $region72: #{tpu_custom_call.1} parent=61 // pred_check_branch
          %704 = sbr.rel (%p702) target = $region74
        $region73: #{tpu_custom_call.1} parent=61 // pred_region
          %706 = vsyncadd %s677, 0
          %s707 = smul.addr %s23, 8
          %s708 = scalar_lea.hbm %s3, %s707
          %s709 = sshll.u32 %s680, 4
          %s710 = int_to_ptr.vmem [resolvable:$true] %s709
          %s711 = sshll.u32 %s708, 4
          %s712 = int_to_ptr.hbm [resolvable:$true] %s711
          %717 = dma.vmem_to_hbm [thread:$0]  %s710, 512, %s712, %s677, 128, 256, 8
        $region74: #{tpu_custom_call.1} parent=61 // pred_fallthru
          _
        // Predicated region
        $region75: #{tpu_custom_call.1} parent=61 // pred_check
          %p718 = pneg %p140
        $region76: #{tpu_custom_call.1} parent=61 // pred_check_branch
          %720 = sbr.rel (%p718) target = $region78
        $region77: #{tpu_custom_call.1} parent=61 // pred_region
          _
        $region78: #{tpu_custom_call.1} parent=61 // pred_fallthru
          _
        // Predicated region
        $region79: #{tpu_custom_call.1} parent=61 // pred_check
          %p721 = pneg %p166
        $region80: #{tpu_custom_call.1} parent=61 // pred_check_branch
          %723 = sbr.rel (%p721) target = $region82
        $region81: #{tpu_custom_call.1} parent=61 // pred_region
          %s724 = smul.u32 16, %s23
        $region82: #{tpu_custom_call.1} parent=61 // pred_fallthru
          _
      $region62: #{tpu_custom_call.1} parent=5 // pred_fallthru
        _
      %p725 = scmp.le.s32.totalorder 2, %s18
      // Predicated region
      $region83: #{tpu_custom_call.1} parent=5 // pred_check
        %p726 = pneg %p725
      $region84: #{tpu_custom_call.1} parent=5 // pred_check_branch
        %728 = sbr.rel (%p726) target = $region86
      $region85: #{tpu_custom_call.1} parent=5 // pred_region
        %s729 = ssub.s32 %s18, 2
        // Predicated region
        $region87: #{tpu_custom_call.1} parent=85 // pred_check
          %p730 = pneg %p94
        $region88: #{tpu_custom_call.1} parent=85 // pred_check_branch
          %732 = sbr.rel (%p730) target = $region90
        $region89: #{tpu_custom_call.1} parent=85 // pred_region
          %s733 = sand.u32 %s79, 1
          %s734 = scalar_lea.sflag [#allocation4], %s733
          %s735 = sand.u32 %s79, 1
          %s736 = scalar_lea.vmem [#allocation3], %s735
          %738 = dma.done %s734, 16
        $region90: #{tpu_custom_call.1} parent=85 // pred_fallthru
          _
        // Predicated region
        $region91: #{tpu_custom_call.1} parent=85 // pred_check
          %p739 = pneg %p120
        $region92: #{tpu_custom_call.1} parent=85 // pred_check_branch
          %741 = sbr.rel (%p739) target = $region94
        $region93: #{tpu_custom_call.1} parent=85 // pred_region
          %s742 = sand.u32 %s105, 1
          %s743 = scalar_lea.sflag [#allocation6], %s742
          %s744 = sand.u32 %s105, 1
          %s745 = smul.addr %s744, 32
          %s746 = scalar_lea.vmem [#allocation5], %s745
          %748 = dma.done %s743, 512
        $region94: #{tpu_custom_call.1} parent=85 // pred_fallthru
          _
        // Predicated region
        $region95: #{tpu_custom_call.1} parent=85 // pred_check
          %p749 = pneg %p146
        $region96: #{tpu_custom_call.1} parent=85 // pred_check_branch
          %751 = sbr.rel (%p749) target = $region98
        $region97: #{tpu_custom_call.1} parent=85 // pred_region
          %p752 = scmp.lt.s32.totalorder %s24, 1
          %s753 = scalar_select %p752, %s24, 1
          %s754 = scalar_lea.vmem %s4, %s753
        $region98: #{tpu_custom_call.1} parent=85 // pred_fallthru
          _
        // Predicated region
        $region99: #{tpu_custom_call.1} parent=85 // pred_check
          %p755 = pneg %p172
        $region100: #{tpu_custom_call.1} parent=85 // pred_check_branch
          %757 = sbr.rel (%p755) target = $region102
        $region101: #{tpu_custom_call.1} parent=85 // pred_region
          %s758 = smul.u32 16, %s24
          %p759 = scmp.lt.s32.totalorder %s758, 31
          %s760 = scalar_select %p759, %s758, 31
          %s761 = smul.addr %s760, 8
          %s762 = scalar_lea.vmem %s5, %s761
        $region102: #{tpu_custom_call.1} parent=85 // pred_fallthru
          _
      $region86: #{tpu_custom_call.1} parent=5 // pred_fallthru
        _
    $region6: #{tpu_custom_call.1} parent=1 // loop_footer
      %s22 = sadd.s32 1, %s18
    $region7: #{tpu_custom_call.1} parent=1 // loop_footer_branch
      %17 = sbr.rel target = $region3
    $region8: #{tpu_custom_call.1} parent=1 // loop_exit
      _
    %763 = vsyncpa [#allocation4], 1
    %s764 = scalar_lea.sflag [#allocation4], 1
    %765 = vsyncpa %s764, 1
    %766 = vsyncpa [#allocation6], 1
    %s767 = scalar_lea.sflag [#allocation6], 1
    %768 = vsyncpa %s767, 1

</llo_original>
